<compile_context>
chip_gen: v5e
topology: v5e:2x2
jax: 0.10.0
libtpu: 0.0.40
codegen_flags: <defaults>
</compile_context>

<pallas_src>
from functools import partial

import jax
import jax.numpy as jnp
from jax.experimental import pallas as pl
from jax.experimental.pallas import tpu as pltpu


def _attention_kernel(s_valid, hid_ref, enc_ref, wht_ref, wet_ref, b_ref,
                      v_ref, out_ref):
    # hid_ref : (bB, H)        last-layer hidden states (compute dtype)
    # enc_ref : (bB, Sp, D)    encoder outputs, S padded to Sp (compute dtype)
    # wht_ref : (H, H)         pre-transposed hidden part of attn.weight
    # wet_ref : (D, H)         pre-transposed encoder part of attn.weight
    # b_ref   : (1, H)  f32    attn.bias
    # v_ref   : (1, H)  f32    attention vector v
    # out_ref : (bB, Sp) f32   softmax attention weights (padded cols = 0)
    bB, Sp, D = enc_ref.shape
    H = hid_ref.shape[-1]

    hid = hid_ref[...]                                    # (bB, H)
    enc2d = enc_ref[...].reshape(bB * Sp, D)              # batch folded for MXU

    # Linear over concatenated [hidden ; encoder], split into two matmuls.
    # Weights arrive pre-transposed; accumulate in f32 on the MXU.
    h_part = jnp.dot(hid, wht_ref[...],
                     preferred_element_type=jnp.float32) + b_ref[...]   # (bB, H)
    e_part = jnp.dot(enc2d, wet_ref[...],
                     preferred_element_type=jnp.float32)                # (bB*Sp, H)

    # Sp % 8 == 0, so this reshape stays within (8,128) tiles (no VMEM copy).
    pre = e_part.reshape(bB, Sp, H) + h_part[:, None, :]                # (bB, Sp, H)

    if enc_ref.dtype == jnp.bfloat16:
        # bf16 tanh: EUP-friendly on v6e/v7x; accumulation below stays f32.
        energy = jnp.tanh(pre.astype(jnp.bfloat16))
    else:
        energy = jnp.tanh(pre)

    # scores[b, s] = sum_h v[h] * energy[b, s, h]  (VPU mul + lane reduce).
    v_row = v_ref[...].reshape(1, 1, H)
    scores = jnp.sum(energy.astype(jnp.float32) * v_row, axis=-1)       # (bB, Sp)

    # Mask padded key positions so they get exactly zero probability.
    if s_valid < Sp:
        col = jax.lax.broadcasted_iota(jnp.int32, (bB, Sp), 1)
        scores = jnp.where(col < s_valid, scores, -jnp.inf)

    # Exact softmax over S (per-row divide costs nothing here).
    m = jnp.max(scores, axis=-1, keepdims=True)
    e = jnp.exp(scores - m)
    denom = jnp.sum(e, axis=-1, keepdims=True)
    out_ref[...] = (e / denom).astype(out_ref.dtype)


def _round_up(x, m):
    return (x + m - 1) // m * m


def _pick_block_b(batch, cap):
    """Largest divisor of `batch` <= cap that is a multiple of 8 or == batch."""
    cap = max(1, min(batch, cap))
    for d in range(cap, 0, -1):
        if batch % d == 0 and (d % 8 == 0 or d == batch):
            return d
    for d in range(cap, 0, -1):      # fallback (pathological batch sizes)
        if batch % d == 0:
            return d
    return 1


@partial(jax.jit, static_argnames=("compute_dtype",))
def lstm_attention(hidden, encoder_outputs, attn_weight, attn_bias, v,
                   *, compute_dtype=None):
    """JAX/Pallas equivalent of LSTM_Attention.forward."""
    L, B, H = hidden.shape
    _, S, D = encoder_outputs.shape
    cdt = jnp.dtype(compute_dtype) if compute_dtype is not None \
        else jnp.dtype(encoder_outputs.dtype)
    in_b = cdt.itemsize

    # ---- S padding: always sublane-aligned (8); lane-dense (128) when the
    # ---- extra encoder HBM traffic is small (or S is tiny anyway). ----------
    s8 = _round_up(S, 8)
    s128 = _round_up(S, 128)
    S_pad = s128 if (S <= 256 or (s128 - s8) * 8 <= s8) else s8

    # ---- plain-JAX glue: last layer, split + pre-transpose Linear weight ----
    hid_last = hidden[-1].astype(cdt)                   # (B, H)
    w_h_t = attn_weight[:, :H].T.astype(cdt)            # (H, H)
    w_e_t = attn_weight[:, H:].T.astype(cdt)            # (D, H)
    b2d = attn_bias.reshape(1, H).astype(jnp.float32)   # (1, H)
    v2d = v.reshape(1, H).astype(jnp.float32)           # (1, H)
    enc = encoder_outputs.astype(cdt)
    if S_pad != S:
        enc = jnp.pad(enc, ((0, 0), (0, S_pad - S), (0, 0)))

    # ---- VMEM-budgeted batch tile -------------------------------------------
    try:
        vmem_cap = int(pltpu.get_tpu_info().vmem_capacity_bytes)
    except Exception:  # pragma: no cover - conservative fallback
        vmem_cap = 64 << 20
    budget = int(vmem_cap * 0.75)        # ~48 MiB on v7x, ~96 MiB on v5e/v6e

    per_row = (2 * S_pad * D * in_b      # double-buffered encoder block
               + 2 * H * in_b            # double-buffered hidden block
               + 2 * S_pad * 4           # double-buffered output block
               + 2 * S_pad * H * 4       # e_part / energy f32 temporaries
               + S_pad * D * 4           # enc reshape/cast temporary
               + 2 * S_pad * 4)          # scores / exp temporaries
    fixed = 2 * (H * H + D * H) * in_b + 16 * H + (2 << 20)   # weights + slack
    avail = max(per_row, budget - fixed)
    cap_b = max(1, int(avail // int(per_row * 1.25)))
    if B >= 64:
        # Keep >= ~16 grid steps so the encoder DMA pipelines on each core.
        cap_b = min(cap_b, max(8, B // 16))
    block_b = _pick_block_b(B, cap_b)
    grid = (B // block_b,)

    cost = pl.CostEstimate(
        flops=int(2 * B * S_pad * D * H + 2 * B * H * H + 2 * B * S_pad * H),
        transcendentals=int(B * S_pad * H + B * S_pad),
        bytes_accessed=int((B * H + B * S_pad * D + H * H + D * H) * in_b
                           + 2 * H * 4 + B * S_pad * 4),
    )

    out_pad = pl.pallas_call(
        partial(_attention_kernel, S),
        out_shape=jax.ShapeDtypeStruct((B, S_pad), jnp.float32),
        grid_spec=pltpu.PrefetchScalarGridSpec(
            num_scalar_prefetch=0,
            grid=grid,
            in_specs=[
                pl.BlockSpec((block_b, H), lambda i: (i, 0)),          # hidden
                pl.BlockSpec((block_b, S_pad, D), lambda i: (i, 0, 0)),  # encoder
                pl.BlockSpec((H, H), lambda i: (0, 0)),                # W_h^T
                pl.BlockSpec((D, H), lambda i: (0, 0)),                # W_e^T
                pl.BlockSpec((1, H), lambda i: (0, 0)),                # bias
                pl.BlockSpec((1, H), lambda i: (0, 0)),                # v
            ],
            out_specs=pl.BlockSpec((block_b, S_pad), lambda i: (i, 0)),
        ),
        compiler_params=pltpu.CompilerParams(
            dimension_semantics=("parallel",),
            vmem_limit_bytes=int(budget),
        ),
        cost_estimate=cost,
    )(hid_last, enc, w_h_t, w_e_t, b2d, v2d)

    return out_pad[:, :S]


def _reference(hidden, encoder_outputs, attn_weight, attn_bias, v):
    """Pure-JAX reference mirroring the PyTorch forward exactly."""
    h = hidden[-1]                                                # (B, H)
    B, S, D = encoder_outputs.shape
    h_rep = jnp.repeat(h[:, None, :], S, axis=1)                  # (B, S, H)
    combined = jnp.concatenate([h_rep, encoder_outputs], axis=2)  # (B, S, H+D)
    energy = jnp.tanh(combined @ attn_weight.T + attn_bias)       # (B, S, H)
    energy_t = jnp.swapaxes(energy, 1, 2)                         # (B, H, S)
    vb = jnp.broadcast_to(v[None, None, :], (B, 1, v.shape[0]))   # (B, 1, H)
    scores = jnp.matmul(vb, energy_t)[:, 0, :]                    # (B, S)
    return jax.nn.softmax(scores, axis=1)


if __name__ == "__main__":
    key = jax.random.PRNGKey(0)

    def make_inputs(key, num_layers, B, S, hidden_dim, input_dim):
        k1, k2, k3, k4, k5 = jax.random.split(key, 5)
        hidden = jax.random.normal(k1, (num_layers, B, hidden_dim), jnp.float32)
        encoder_outputs = jax.random.normal(k2, (B, S, input_dim), jnp.float32)
        attn_weight = jax.random.normal(
            k3, (hidden_dim, hidden_dim + input_dim), jnp.float32) * 0.1
        attn_bias = jax.random.normal(k4, (hidden_dim,), jnp.float32) * 0.1
        v = jax.random.uniform(k5, (hidden_dim,), jnp.float32)
        return hidden, encoder_outputs, attn_weight, attn_bias, v

    # ---- primary small-shape case (f32, exact softmax) ----------------------
    num_layers, B, S, hidden_dim, input_dim = 2, 2, 8, 32, 16
    args = make_inputs(key, num_layers, B, S, hidden_dim, input_dim)
    out = jax.block_until_ready(lstm_attention(*args))
    ref = _reference(*args)
    assert out.shape == (B, S)
    assert jnp.allclose(out, ref, atol=1e-4, rtol=1e-4), (
        f"max abs err {jnp.max(jnp.abs(out - ref))}")
    assert jnp.allclose(jnp.sum(out, axis=1), 1.0, atol=1e-5)

    # ---- exercise the S-padding / masking path (S not a multiple of 8) ------
    args2 = make_inputs(jax.random.PRNGKey(1), 2, 4, 40, 32, 16)
    out2 = jax.block_until_ready(lstm_attention(*args2))
    ref2 = _reference(*args2)
    assert out2.shape == (4, 40)
    assert jnp.allclose(out2, ref2, atol=1e-4, rtol=1e-4), (
        f"max abs err {jnp.max(jnp.abs(out2 - ref2))}")
    assert jnp.allclose(jnp.sum(out2, axis=1), 1.0, atol=1e-5)

    # ---- bf16 compute path (MXU + tanh in bf16, softmax in f32) -------------
    out_bf16 = jax.block_until_ready(
        lstm_attention(*args, compute_dtype=jnp.bfloat16))
    assert jnp.allclose(out_bf16, ref, atol=5e-2, rtol=5e-2), (
        f"bf16 max abs err {jnp.max(jnp.abs(out_bf16 - ref))}")

    print("KERNEL_OK")
</pallas_src>

<mosaic_0001>
module attributes {stable_mosaic.version = 11 : i64} {
  func.func @_attention_kernel(%arg0: i32, %arg1: memref<2x32xf32, #tpu.memory_space<vmem>>, %arg2: memref<2x128x16xf32, #tpu.memory_space<vmem>>, %arg3: memref<32x32xf32, #tpu.memory_space<vmem>>, %arg4: memref<16x32xf32, #tpu.memory_space<vmem>>, %arg5: memref<1x32xf32, #tpu.memory_space<vmem>>, %arg6: memref<1x32xf32, #tpu.memory_space<vmem>>, %arg7: memref<2x128xf32, #tpu.memory_space<vmem>>) attributes {dimension_semantics = [#tpu.dimension_semantics<parallel>], iteration_bounds = array<i64: 1>, scalar_prefetch = 0 : i64, scratch_operands = 0 : i64, tpu.core_type = #tpu.core_type<tc>, window_params = [{transform_indices = @transform_0, window_bounds = array<i64: 2, 32>}, {transform_indices = @transform_1, window_bounds = array<i64: 2, 128, 16>}, {pipeline_mode = #tpu.pipeline_mode<synchronous>, transform_indices = @transform_2, window_bounds = array<i64: 32, 32>}, {pipeline_mode = #tpu.pipeline_mode<synchronous>, transform_indices = @transform_3, window_bounds = array<i64: 16, 32>}, {pipeline_mode = #tpu.pipeline_mode<synchronous>, transform_indices = @transform_4, window_bounds = array<i64: 1, 32>}, {pipeline_mode = #tpu.pipeline_mode<synchronous>, transform_indices = @transform_5, window_bounds = array<i64: 1, 32>}, {transform_indices = @transform_6, window_bounds = array<i64: 2, 128>}]} {
    %c0 = arith.constant 0 : index
    %c0_0 = arith.constant 0 : index
    %0 = vector.load %arg1[%c0, %c0_0] : memref<2x32xf32, #tpu.memory_space<vmem>>, vector<2x32xf32>
    %c0_1 = arith.constant 0 : index
    %c0_2 = arith.constant 0 : index
    %c0_3 = arith.constant 0 : index
    %1 = vector.load %arg2[%c0_1, %c0_2, %c0_3] : memref<2x128x16xf32, #tpu.memory_space<vmem>>, vector<2x128x16xf32>
    %2 = vector.shape_cast %1 : vector<2x128x16xf32> to vector<256x16xf32>
    %c0_4 = arith.constant 0 : index
    %c0_5 = arith.constant 0 : index
    %3 = vector.load %arg3[%c0_4, %c0_5] : memref<32x32xf32, #tpu.memory_space<vmem>>, vector<32x32xf32>
    %cst = arith.constant dense<0.000000e+00> : vector<2x32xf32>
    %4 = tpu.matmul %0, %3, %cst {dimension_numbers = #tpu.dot_dimension_numbers<[1], [0], [0], [1], [0, 0, 1, 1], [], []>} : vector<2x32xf32>, vector<32x32xf32>, vector<2x32xf32> -> vector<2x32xf32>
    %c0_6 = arith.constant 0 : index
    %c0_7 = arith.constant 0 : index
    %5 = vector.load %arg5[%c0_6, %c0_7] : memref<1x32xf32, #tpu.memory_space<vmem>>, vector<1x32xf32>
    %6 = vector.broadcast %5 : vector<1x32xf32> to vector<2x32xf32>
    %7 = arith.addf %4, %6 : vector<2x32xf32>
    %c0_8 = arith.constant 0 : index
    %c0_9 = arith.constant 0 : index
    %8 = vector.load %arg4[%c0_8, %c0_9] : memref<16x32xf32, #tpu.memory_space<vmem>>, vector<16x32xf32>
    %cst_10 = arith.constant dense<0.000000e+00> : vector<256x32xf32>
    %9 = tpu.matmul %2, %8, %cst_10 {dimension_numbers = #tpu.dot_dimension_numbers<[1], [0], [0], [1], [0, 0, 1, 1], [], []>} : vector<256x16xf32>, vector<16x32xf32>, vector<256x32xf32> -> vector<256x32xf32>
    %10 = vector.shape_cast %9 : vector<256x32xf32> to vector<2x128x32xf32>
    %11 = vector.shape_cast %7 : vector<2x32xf32> to vector<2x1x32xf32>
    %12 = vector.broadcast %11 : vector<2x1x32xf32> to vector<2x128x32xf32>
    %13 = arith.addf %10, %12 : vector<2x128x32xf32>
    %14 = math.tanh %13 : vector<2x128x32xf32>
    %c0_11 = arith.constant 0 : index
    %c0_12 = arith.constant 0 : index
    %15 = vector.load %arg6[%c0_11, %c0_12] : memref<1x32xf32, #tpu.memory_space<vmem>>, vector<1x32xf32>
    %16 = vector.shape_cast %15 : vector<1x32xf32> to vector<1x1x32xf32>
    %17 = vector.broadcast %16 : vector<1x1x32xf32> to vector<2x128x32xf32>
    %18 = arith.mulf %14, %17 : vector<2x128x32xf32>
    %cst_13 = arith.constant dense<0.000000e+00> : vector<2x128xf32>
    %19 = vector.multi_reduction <add>, %18, %cst_13 [2] : vector<2x128x32xf32> to vector<2x128xf32>
    %20 = tpu.iota {dimensions = array<i32: 1>} : vector<2x128xi32>
    %c8_i32 = arith.constant 8 : i32
    %21 = vector.broadcast %c8_i32 : i32 to vector<2x128xi32>
    %22 = arith.cmpi slt, %20, %21 : vector<2x128xi32>
    %cst_14 = arith.constant 0xFF800000 : f32
    %23 = vector.broadcast %cst_14 : f32 to vector<2x128xf32>
    %24 = arith.select %22, %19, %23 : vector<2x128xi1>, vector<2x128xf32>
    %cst_15 = arith.constant dense<0xFF800000> : vector<2xf32>
    %25 = vector.multi_reduction <maximumf>, %24, %cst_15 [1] : vector<2x128xf32> to vector<2xf32>
    %26 = vector.shape_cast %25 : vector<2xf32> to vector<2x1xf32>
    %27 = vector.broadcast %26 : vector<2x1xf32> to vector<2x128xf32>
    %28 = arith.subf %24, %27 : vector<2x128xf32>
    %29 = math.exp %28 : vector<2x128xf32>
    %cst_16 = arith.constant dense<0.000000e+00> : vector<2xf32>
    %30 = vector.multi_reduction <add>, %29, %cst_16 [1] : vector<2x128xf32> to vector<2xf32>
    %31 = vector.shape_cast %30 : vector<2xf32> to vector<2x1xf32>
    %32 = vector.broadcast %31 : vector<2x1xf32> to vector<2x128xf32>
    %33 = arith.divf %29, %32 : vector<2x128xf32>
    %c0_17 = arith.constant 0 : index
    %c0_18 = arith.constant 0 : index
    %34 = vector.load %arg7[%c0_17, %c0_18] : memref<2x128xf32, #tpu.memory_space<vmem>>, vector<2x128xf32>
    tpu.vector_store %arg7[%c0_17, %c0_18], %33 {strides = array<i32>} : memref<2x128xf32, #tpu.memory_space<vmem>>, vector<2x128xf32>,
    return
  }
  func.func @transform_0(%arg0: i32) -> (i32, i32) {
    %c0_i32 = arith.constant 0 : i32
    %c0_i32_0 = arith.constant 0 : i32
    return %arg0, %c0_i32 : i32, i32
  }
  func.func @transform_1(%arg0: i32) -> (i32, i32, i32) {
    %c0_i32 = arith.constant 0 : i32
    %c0_i32_0 = arith.constant 0 : i32
    %c0_i32_1 = arith.constant 0 : i32
    return %arg0, %c0_i32, %c0_i32_0 : i32, i32, i32
  }
  func.func @transform_2(%arg0: i32) -> (i32, i32) {
    %c0_i32 = arith.constant 0 : i32
    %c0_i32_0 = arith.constant 0 : i32
    %c0_i32_1 = arith.constant 0 : i32
    return %c0_i32, %c0_i32_0 : i32, i32
  }
  func.func @transform_3(%arg0: i32) -> (i32, i32) {
    %c0_i32 = arith.constant 0 : i32
    %c0_i32_0 = arith.constant 0 : i32
    %c0_i32_1 = arith.constant 0 : i32
    return %c0_i32, %c0_i32_0 : i32, i32
  }
  func.func @transform_4(%arg0: i32) -> (i32, i32) {
    %c0_i32 = arith.constant 0 : i32
    %c0_i32_0 = arith.constant 0 : i32
    %c0_i32_1 = arith.constant 0 : i32
    return %c0_i32, %c0_i32_0 : i32, i32
  }
  func.func @transform_5(%arg0: i32) -> (i32, i32) {
    %c0_i32 = arith.constant 0 : i32
    %c0_i32_0 = arith.constant 0 : i32
    %c0_i32_1 = arith.constant 0 : i32
    return %c0_i32, %c0_i32_0 : i32, i32
  }
  func.func @transform_6(%arg0: i32) -> (i32, i32) {
    %c0_i32 = arith.constant 0 : i32
    %c0_i32_0 = arith.constant 0 : i32
    return %arg0, %c0_i32 : i32, i32
  }
}

</mosaic_0001>

<llo_original>
// kernel: lstm_attention.1
$region0: #{lstm_attention.1}
  #allocation0 [shape = 'u32[]', space=smem, size = 0x4, offset = 0x4, fixed_abs, tag = 'smem constant byte address 0x4 - core index']
  #allocation1 [shape = 'u32[72,128]{1,0:T(1,128)}', space=vmem, size = 0x9000, scoped, tag = 'internal scratch']
  %s0 = inlined_call_operand.vmem [shape: f32[2,32], index: 0, kind: input, shape index: {}]
  %s1 = inlined_call_operand.vmem [shape: f32[2,128,16], index: 1, kind: input, shape index: {}]
  %s2 = inlined_call_operand.vmem [shape: f32[32,32], index: 2, kind: input, shape index: {}]
  %s3 = inlined_call_operand.vmem [shape: f32[16,32], index: 3, kind: input, shape index: {}]
  %s4 = inlined_call_operand.vmem [shape: f32[1,32], index: 4, kind: input, shape index: {}]
  %s5 = inlined_call_operand.vmem [shape: f32[1,32], index: 5, kind: input, shape index: {}]
  %s6 = inlined_call_operand.hbm [shape: f32[2,128], index: 6, kind: output, shape index: {}]
  %s7 = sld [smem:[#allocation0]]
  $region34: #{lstm_attention.1} parent=0
    _
  %s9 = ssub.s32 1, %s7
  %s10 = scalar_select 0, %s9, %s7
  $region1: #{lstm_attention.1} parent=0
    #allocation2 [shape = 'u8[1024]{0}', space=vmem, size = 0x400, scoped, tag = 'output window, operand 0, single buffered']
    #allocation3 [shape = 's32[1]{0}', space=sflag, size = 0x4, scoped, tag = 'scoped memory for lstm_attention.1']
    %11 = vsyncpa [#allocation3], 0
    // Predicated region
    $region2: #{lstm_attention.1} parent=1 // pred_check
      _
    $region3: #{lstm_attention.1} parent=1 // pred_check_branch
      %13 = sbr.rel (0) target = $region5
    $region4: #{lstm_attention.1} parent=1 // pred_region
      _
    $region5: #{lstm_attention.1} parent=1 // pred_fallthru
      _
    // Predicated region
    $region6: #{lstm_attention.1} parent=1 // pred_check
      _
    $region7: #{lstm_attention.1} parent=1 // pred_check_branch
      %15 = sbr.rel (0) target = $region9
    $region8: #{lstm_attention.1} parent=1 // pred_region
      _
    $region9: #{lstm_attention.1} parent=1 // pred_fallthru
      _
    // Predicated region
    $region10: #{lstm_attention.1} parent=1 // pred_check
      _
    $region11: #{lstm_attention.1} parent=1 // pred_check_branch
      %17 = sbr.rel (0) target = $region13
    $region12: #{lstm_attention.1} parent=1 // pred_region
      _
    $region13: #{lstm_attention.1} parent=1 // pred_fallthru
      _
    // Predicated region
    $region14: #{lstm_attention.1} parent=1 // pred_check
      _
    $region15: #{lstm_attention.1} parent=1 // pred_check_branch
      %19 = sbr.rel (0) target = $region17
    $region16: #{lstm_attention.1} parent=1 // pred_region
      _
    $region17: #{lstm_attention.1} parent=1 // pred_fallthru
      _
    // Predicated region
    $region18: #{lstm_attention.1} parent=1 // pred_check
      _
    $region19: #{lstm_attention.1} parent=1 // pred_check_branch
      %21 = sbr.rel (0) target = $region21
    $region20: #{lstm_attention.1} parent=1 // pred_region
      _
    $region21: #{lstm_attention.1} parent=1 // pred_fallthru
      _
    // Predicated region
    $region22: #{lstm_attention.1} parent=1 // pred_check
      _
    $region23: #{lstm_attention.1} parent=1 // pred_check_branch
      %23 = sbr.rel (0) target = $region25
    $region24: #{lstm_attention.1} parent=1 // pred_region
      _
    $region25: #{lstm_attention.1} parent=1 // pred_fallthru
      _
    %v24 = vld [vmem:[%s0] sm:$0x3]
    %v25 = vld [vmem:[%s1] sm:$0xff]
    %v26 = vld [vmem:[%s1 + $0x8] sm:$0xff]
    %v27 = vld [vmem:[%s1 + $0x10] sm:$0xff]
    %v28 = vld [vmem:[%s1 + $0x18] sm:$0xff]
    %v29 = vld [vmem:[%s1 + $0x20] sm:$0xff]
    %v30 = vld [vmem:[%s1 + $0x28] sm:$0xff]
    %v31 = vld [vmem:[%s1 + $0x30] sm:$0xff]
    %v32 = vld [vmem:[%s1 + $0x38] sm:$0xff]
    %v33 = vld [vmem:[%s1 + $0x40] sm:$0xff]
    %v34 = vld [vmem:[%s1 + $0x48] sm:$0xff]
    %v35 = vld [vmem:[%s1 + $0x50] sm:$0xff]
    %v36 = vld [vmem:[%s1 + $0x58] sm:$0xff]
    %v37 = vld [vmem:[%s1 + $0x60] sm:$0xff]
    %v38 = vld [vmem:[%s1 + $0x68] sm:$0xff]
    %v39 = vld [vmem:[%s1 + $0x70] sm:$0xff]
    %v40 = vld [vmem:[%s1 + $0x78] sm:$0xff]
    %v41 = vld [vmem:[%s1 + $0x80] sm:$0xff]
    %v42 = vld [vmem:[%s1 + $0x88] sm:$0xff]
    %v43 = vld [vmem:[%s1 + $0x90] sm:$0xff]
    %v44 = vld [vmem:[%s1 + $0x98] sm:$0xff]
    %v45 = vld [vmem:[%s1 + $0xa0] sm:$0xff]
    %v46 = vld [vmem:[%s1 + $0xa8] sm:$0xff]
    %v47 = vld [vmem:[%s1 + $0xb0] sm:$0xff]
    %v48 = vld [vmem:[%s1 + $0xb8] sm:$0xff]
    %v49 = vld [vmem:[%s1 + $0xc0] sm:$0xff]
    %v50 = vld [vmem:[%s1 + $0xc8] sm:$0xff]
    %v51 = vld [vmem:[%s1 + $0xd0] sm:$0xff]
    %v52 = vld [vmem:[%s1 + $0xd8] sm:$0xff]
    %v53 = vld [vmem:[%s1 + $0xe0] sm:$0xff]
    %v54 = vld [vmem:[%s1 + $0xe8] sm:$0xff]
    %v55 = vld [vmem:[%s1 + $0xf0] sm:$0xff]
    %v56 = vld [vmem:[%s1 + $0xf8] sm:$0xff]
    %v57 = vld [vmem:[%s2] sm:$0xff]
    %v58 = vld [vmem:[%s2 + $0x8] sm:$0xff]
    %v59 = vld [vmem:[%s2 + $0x10] sm:$0xff]
    %v60 = vld [vmem:[%s2 + $0x18] sm:$0xff]
    %v61 = vld [vmem:[%s4] sm:$0x1]
    %v63 = vperm.slane %v61, 0
    %vm65 = vcmask 261120
    %v67 = vsel %vm65, %v24, 0
    %69 = vmatpush.msra.mxu0 0.0
    %70 = vmatpush.msra.mxu0 0.0
    %71 = vmatpush.msra.mxu0 0.0
    %72 = vmatpush.msra.mxu0 0.0
    %73 = vmatpush.msra.mxu0 0.0
    %74 = vmatpush.msra.mxu0 0.0
    %75 = vmatpush.msra.mxu0 0.0
    %76 = vmatpush.msra.mxu0 0.0
    %77 = vmatpush.msra.mxu0 0.0
    %78 = vmatpush.msra.mxu0 0.0
    %79 = vmatpush.msra.mxu0 0.0
    %80 = vmatpush.msra.mxu0 0.0
    %81 = vmatpush.msra.mxu0 %v60
    %82 = vmatpush.msra.mxu0 %v59
    %83 = vmatpush.msra.mxu0 %v58
    %84 = vmatpush.msra.mxu0 %v57
    %85 = vmatmul.f32.gmra.mxu0 %v67
    %v86 = vpop.f32.mrf.mxu0
    %v87 = vadd.f32 %v63, %v86
    %88 = vdwg.mxu0
    %v89 = vld [vmem:[%s3] sm:$0xff]
    %v90 = vld [vmem:[%s3 + $0x8] sm:$0xff]
    %vm91 = vcmask 130048
    %v93 = vsel %vm91, %v25, 0
    %v96 = vsel %vm91, %v26, 0
    %v99 = vsel %vm91, %v27, 0
    %v102 = vsel %vm91, %v28, 0
    %v105 = vsel %vm91, %v29, 0
    %v108 = vsel %vm91, %v30, 0
    %v111 = vsel %vm91, %v31, 0
    %v114 = vsel %vm91, %v32, 0
    %v117 = vsel %vm91, %v33, 0
    %v120 = vsel %vm91, %v34, 0
    %v123 = vsel %vm91, %v35, 0
    %v126 = vsel %vm91, %v36, 0
    %v129 = vsel %vm91, %v37, 0
    %v132 = vsel %vm91, %v38, 0
    %v135 = vsel %vm91, %v39, 0
    %v138 = vsel %vm91, %v40, 0
    %v141 = vsel %vm91, %v41, 0
    %v144 = vsel %vm91, %v42, 0
    %v147 = vsel %vm91, %v43, 0
    %v150 = vsel %vm91, %v44, 0
    %v153 = vsel %vm91, %v45, 0
    %v156 = vsel %vm91, %v46, 0
    %v159 = vsel %vm91, %v47, 0
    %v162 = vsel %vm91, %v48, 0
    %v165 = vsel %vm91, %v49, 0
    %v168 = vsel %vm91, %v50, 0
    %v171 = vsel %vm91, %v51, 0
    %v174 = vsel %vm91, %v52, 0
    %v177 = vsel %vm91, %v53, 0
    %v180 = vsel %vm91, %v54, 0
    %v183 = vsel %vm91, %v55, 0
    %v186 = vsel %vm91, %v56, 0
    %188 = vmatpush.msra.mxu0 0.0
    %189 = vmatpush.msra.mxu0 0.0
    %190 = vmatpush.msra.mxu0 0.0
    %191 = vmatpush.msra.mxu0 0.0
    %192 = vmatpush.msra.mxu0 0.0
    %193 = vmatpush.msra.mxu0 0.0
    %194 = vmatpush.msra.mxu0 0.0
    %195 = vmatpush.msra.mxu0 0.0
    %196 = vmatpush.msra.mxu0 0.0
    %197 = vmatpush.msra.mxu0 0.0
    %198 = vmatpush.msra.mxu0 0.0
    %199 = vmatpush.msra.mxu0 0.0
    %200 = vmatpush.msra.mxu0 0.0
    %201 = vmatpush.msra.mxu0 0.0
    %202 = vmatpush.msra.mxu0 %v90
    %203 = vmatpush.msra.mxu0 %v89
    %204 = vmatmul.f32.gmra.mxu0 %v93
    %v205 = vpop.f32.mrf.mxu0
    %v206 = vadd.f32 0.0, %v205
    %207 = vmatmul.f32.gmra.mxu0 %v96
    %v208 = vpop.f32.mrf.mxu0
    %v209 = vadd.f32 0.0, %v208
    %210 = vmatmul.f32.gmra.mxu0 %v99
    %v211 = vpop.f32.mrf.mxu0
    %v212 = vadd.f32 0.0, %v211
    %213 = vmatmul.f32.gmra.mxu0 %v102
    %v214 = vpop.f32.mrf.mxu0
    %v215 = vadd.f32 0.0, %v214
    %216 = vmatmul.f32.gmra.mxu0 %v105
    %v217 = vpop.f32.mrf.mxu0
    %v218 = vadd.f32 0.0, %v217
    %219 = vmatmul.f32.gmra.mxu0 %v108
    %v220 = vpop.f32.mrf.mxu0
    %v221 = vadd.f32 0.0, %v220
    %222 = vmatmul.f32.gmra.mxu0 %v111
    %v223 = vpop.f32.mrf.mxu0
    %v224 = vadd.f32 0.0, %v223
    %225 = vmatmul.f32.gmra.mxu0 %v114
    %v226 = vpop.f32.mrf.mxu0
    %v227 = vadd.f32 0.0, %v226
    %228 = vmatmul.f32.gmra.mxu0 %v117
    %v229 = vpop.f32.mrf.mxu0
    %v230 = vadd.f32 0.0, %v229
    %231 = vmatmul.f32.gmra.mxu0 %v120
    %v232 = vpop.f32.mrf.mxu0
    %v233 = vadd.f32 0.0, %v232
    %234 = vmatmul.f32.gmra.mxu0 %v123
    %v235 = vpop.f32.mrf.mxu0
    %v236 = vadd.f32 0.0, %v235
    %237 = vmatmul.f32.gmra.mxu0 %v126
    %v238 = vpop.f32.mrf.mxu0
    %v239 = vadd.f32 0.0, %v238
    %240 = vmatmul.f32.gmra.mxu0 %v129
    %v241 = vpop.f32.mrf.mxu0
    %v242 = vadd.f32 0.0, %v241
    %243 = vmatmul.f32.gmra.mxu0 %v132
    %v244 = vpop.f32.mrf.mxu0
    %v245 = vadd.f32 0.0, %v244
    %246 = vmatmul.f32.gmra.mxu0 %v135
    %v247 = vpop.f32.mrf.mxu0
    %v248 = vadd.f32 0.0, %v247
    %249 = vmatmul.f32.gmra.mxu0 %v138
    %v250 = vpop.f32.mrf.mxu0
    %v251 = vadd.f32 0.0, %v250
    %252 = vmatmul.f32.gmra.mxu0 %v141
    %v253 = vpop.f32.mrf.mxu0
    %v254 = vadd.f32 0.0, %v253
    %255 = vmatmul.f32.gmra.mxu0 %v144
    %v256 = vpop.f32.mrf.mxu0
    %v257 = vadd.f32 0.0, %v256
    %258 = vmatmul.f32.gmra.mxu0 %v147
    %v259 = vpop.f32.mrf.mxu0
    %v260 = vadd.f32 0.0, %v259
    %261 = vmatmul.f32.gmra.mxu0 %v150
    %v262 = vpop.f32.mrf.mxu0
    %v263 = vadd.f32 0.0, %v262
    %264 = vmatmul.f32.gmra.mxu0 %v153
    %v265 = vpop.f32.mrf.mxu0
    %v266 = vadd.f32 0.0, %v265
    %267 = vmatmul.f32.gmra.mxu0 %v156
    %v268 = vpop.f32.mrf.mxu0
    %v269 = vadd.f32 0.0, %v268
    %270 = vmatmul.f32.gmra.mxu0 %v159
    %v271 = vpop.f32.mrf.mxu0
    %v272 = vadd.f32 0.0, %v271
    %273 = vmatmul.f32.gmra.mxu0 %v162
    %v274 = vpop.f32.mrf.mxu0
    %v275 = vadd.f32 0.0, %v274
    %276 = vmatmul.f32.gmra.mxu0 %v165
    %v277 = vpop.f32.mrf.mxu0
    %v278 = vadd.f32 0.0, %v277
    %279 = vmatmul.f32.gmra.mxu0 %v168
    %v280 = vpop.f32.mrf.mxu0
    %v281 = vadd.f32 0.0, %v280
    %282 = vmatmul.f32.gmra.mxu0 %v171
    %v283 = vpop.f32.mrf.mxu0
    %v284 = vadd.f32 0.0, %v283
    %285 = vmatmul.f32.gmra.mxu0 %v174
    %v286 = vpop.f32.mrf.mxu0
    %v287 = vadd.f32 0.0, %v286
    %288 = vmatmul.f32.gmra.mxu0 %v177
    %v289 = vpop.f32.mrf.mxu0
    %v290 = vadd.f32 0.0, %v289
    %291 = vmatmul.f32.gmra.mxu0 %v180
    %v292 = vpop.f32.mrf.mxu0
    %v293 = vadd.f32 0.0, %v292
    %294 = vmatmul.f32.gmra.mxu0 %v183
    %v295 = vpop.f32.mrf.mxu0
    %v296 = vadd.f32 0.0, %v295
    %297 = vmatmul.f32.gmra.mxu0 %v186
    %v298 = vpop.f32.mrf.mxu0
    %v299 = vadd.f32 0.0, %v298
    %300 = vdwg.mxu0
    %v302 = vrot.slane %v87, 1
    %v303 = vperm.slane %v87, 0
    %v304 = vperm.slane %v302, 0
    %v307 = vadd.f32 %v206, %v303
    %v308 = vadd.f32 %v209, %v303
    %v309 = vadd.f32 %v212, %v303
    %v310 = vadd.f32 %v215, %v303
    %v311 = vadd.f32 %v218, %v303
    %v312 = vadd.f32 %v221, %v303
    %v313 = vadd.f32 %v224, %v303
    %v314 = vadd.f32 %v227, %v303
    %v315 = vadd.f32 %v230, %v303
    %v316 = vadd.f32 %v233, %v303
    %v317 = vadd.f32 %v236, %v303
    %v318 = vadd.f32 %v239, %v303
    %v319 = vadd.f32 %v242, %v303
    %v320 = vadd.f32 %v245, %v303
    %v321 = vadd.f32 %v248, %v303
    %v322 = vadd.f32 %v251, %v303
    %v323 = vadd.f32 %v254, %v304
    %v324 = vadd.f32 %v257, %v304
    %v325 = vadd.f32 %v260, %v304
    %v326 = vadd.f32 %v263, %v304
    %v327 = vadd.f32 %v266, %v304
    %v328 = vadd.f32 %v269, %v304
    %v329 = vadd.f32 %v272, %v304
    %v330 = vadd.f32 %v275, %v304
    %v331 = vadd.f32 %v278, %v304
    %v332 = vadd.f32 %v281, %v304
    %v333 = vadd.f32 %v284, %v304
    %v334 = vadd.f32 %v287, %v304
    %v335 = vadd.f32 %v290, %v304
    %v336 = vadd.f32 %v293, %v304
    %v337 = vadd.f32 %v296, %v304
    %v338 = vadd.f32 %v299, %v304
    %v339 = vtanh.pop %v307
    %v340 = vtanh.pop %v308
    %v341 = vtanh.pop %v309
    %v342 = vtanh.pop %v310
    %v343 = vtanh.pop %v311
    %v344 = vtanh.pop %v312
    %v345 = vtanh.pop %v313
    %v346 = vtanh.pop %v314
    %v347 = vtanh.pop %v315
    %v348 = vtanh.pop %v316
    %v349 = vtanh.pop %v317
    %v350 = vtanh.pop %v318
    %v351 = vtanh.pop %v319
    %v352 = vtanh.pop %v320
    %v353 = vtanh.pop %v321
    %v354 = vtanh.pop %v322
    %v355 = vtanh.pop %v323
    %v356 = vtanh.pop %v324
    %v357 = vtanh.pop %v325
    %v358 = vtanh.pop %v326
    %v359 = vtanh.pop %v327
    %v360 = vtanh.pop %v328
    %v361 = vtanh.pop %v329
    %v362 = vtanh.pop %v330
    %v363 = vtanh.pop %v331
    %v364 = vtanh.pop %v332
    %v365 = vtanh.pop %v333
    %v366 = vtanh.pop %v334
    %v367 = vtanh.pop %v335
    %v368 = vtanh.pop %v336
    %v369 = vtanh.pop %v337
    %v370 = vtanh.pop %v338
    %v371 = vld [vmem:[%s5] sm:$0x1]
    %v373 = vperm.slane %v371, 0
    %v375 = vmul.f32 %v339, %v373
    %v376 = vmul.f32 %v340, %v373
    %v377 = vmul.f32 %v341, %v373
    %v378 = vmul.f32 %v342, %v373
    %v379 = vmul.f32 %v343, %v373
    %v380 = vmul.f32 %v344, %v373
    %v381 = vmul.f32 %v345, %v373
    %v382 = vmul.f32 %v346, %v373
    %v383 = vmul.f32 %v347, %v373
    %v384 = vmul.f32 %v348, %v373
    %v385 = vmul.f32 %v349, %v373
    %v386 = vmul.f32 %v350, %v373
    %v387 = vmul.f32 %v351, %v373
    %v388 = vmul.f32 %v352, %v373
    %v389 = vmul.f32 %v353, %v373
    %v390 = vmul.f32 %v354, %v373
    %v391 = vmul.f32 %v355, %v373
    %v392 = vmul.f32 %v356, %v373
    %v393 = vmul.f32 %v357, %v373
    %v394 = vmul.f32 %v358, %v373
    %v395 = vmul.f32 %v359, %v373
    %v396 = vmul.f32 %v360, %v373
    %v397 = vmul.f32 %v361, %v373
    %v398 = vmul.f32 %v362, %v373
    %v399 = vmul.f32 %v363, %v373
    %v400 = vmul.f32 %v364, %v373
    %v401 = vmul.f32 %v365, %v373
    %v402 = vmul.f32 %v366, %v373
    %v403 = vmul.f32 %v367, %v373
    %v404 = vmul.f32 %v368, %v373
    %v405 = vmul.f32 %v369, %v373
    %v406 = vmul.f32 %v370, %v373
    %v407 = vsel %vm65, %v375, 0.0
    %408 = vadd.xlane.f32.xlu0 %v407
    %v409 = vpop.xlane.xlu0 %408
    %v410 = vsel %vm65, %v376, 0.0
    %411 = vadd.xlane.f32.xlu0 %v410
    %v412 = vpop.xlane.xlu0 %411
    %v413 = vsel %vm65, %v377, 0.0
    %414 = vadd.xlane.f32.xlu0 %v413
    %v415 = vpop.xlane.xlu0 %414
    %v416 = vsel %vm65, %v378, 0.0
    %417 = vadd.xlane.f32.xlu0 %v416
    %v418 = vpop.xlane.xlu0 %417
    %v419 = vsel %vm65, %v379, 0.0
    %420 = vadd.xlane.f32.xlu0 %v419
    %v421 = vpop.xlane.xlu0 %420
    %v422 = vsel %vm65, %v380, 0.0
    %423 = vadd.xlane.f32.xlu0 %v422
    %v424 = vpop.xlane.xlu0 %423
    %v425 = vsel %vm65, %v381, 0.0
    %426 = vadd.xlane.f32.xlu0 %v425
    %v427 = vpop.xlane.xlu0 %426
    %v428 = vsel %vm65, %v382, 0.0
    %429 = vadd.xlane.f32.xlu0 %v428
    %v430 = vpop.xlane.xlu0 %429
    %v431 = vsel %vm65, %v383, 0.0
    %432 = vadd.xlane.f32.xlu0 %v431
    %v433 = vpop.xlane.xlu0 %432
    %v434 = vsel %vm65, %v384, 0.0
    %435 = vadd.xlane.f32.xlu0 %v434
    %v436 = vpop.xlane.xlu0 %435
    %v437 = vsel %vm65, %v385, 0.0
    %438 = vadd.xlane.f32.xlu0 %v437
    %v439 = vpop.xlane.xlu0 %438
    %v440 = vsel %vm65, %v386, 0.0
    %441 = vadd.xlane.f32.xlu0 %v440
    %v442 = vpop.xlane.xlu0 %441
    %v443 = vsel %vm65, %v387, 0.0
    %444 = vadd.xlane.f32.xlu0 %v443
    %v445 = vpop.xlane.xlu0 %444
    %v446 = vsel %vm65, %v388, 0.0
    %447 = vadd.xlane.f32.xlu0 %v446
    %v448 = vpop.xlane.xlu0 %447
    %v449 = vsel %vm65, %v389, 0.0
    %450 = vadd.xlane.f32.xlu0 %v449
    %v451 = vpop.xlane.xlu0 %450
    %v452 = vsel %vm65, %v390, 0.0
    %453 = vadd.xlane.f32.xlu0 %v452
    %v454 = vpop.xlane.xlu0 %453
    %v455 = vsel %vm65, %v391, 0.0
    %456 = vadd.xlane.f32.xlu0 %v455
    %v457 = vpop.xlane.xlu0 %456
    %v458 = vsel %vm65, %v392, 0.0
    %459 = vadd.xlane.f32.xlu0 %v458
    %v460 = vpop.xlane.xlu0 %459
    %v461 = vsel %vm65, %v393, 0.0
    %462 = vadd.xlane.f32.xlu0 %v461
    %v463 = vpop.xlane.xlu0 %462
    %v464 = vsel %vm65, %v394, 0.0
    %465 = vadd.xlane.f32.xlu0 %v464
    %v466 = vpop.xlane.xlu0 %465
    %v467 = vsel %vm65, %v395, 0.0
    %468 = vadd.xlane.f32.xlu0 %v467
    %v469 = vpop.xlane.xlu0 %468
    %v470 = vsel %vm65, %v396, 0.0
    %471 = vadd.xlane.f32.xlu0 %v470
    %v472 = vpop.xlane.xlu0 %471
    %v473 = vsel %vm65, %v397, 0.0
    %474 = vadd.xlane.f32.xlu0 %v473
    %v475 = vpop.xlane.xlu0 %474
    %v476 = vsel %vm65, %v398, 0.0
    %477 = vadd.xlane.f32.xlu0 %v476
    %v478 = vpop.xlane.xlu0 %477
    %v479 = vsel %vm65, %v399, 0.0
    %480 = vadd.xlane.f32.xlu0 %v479
    %v481 = vpop.xlane.xlu0 %480
    %v482 = vsel %vm65, %v400, 0.0
    %483 = vadd.xlane.f32.xlu0 %v482
    %v484 = vpop.xlane.xlu0 %483
    %v485 = vsel %vm65, %v401, 0.0
    %486 = vadd.xlane.f32.xlu0 %v485
    %v487 = vpop.xlane.xlu0 %486
    %v488 = vsel %vm65, %v402, 0.0
    %489 = vadd.xlane.f32.xlu0 %v488
    %v490 = vpop.xlane.xlu0 %489
    %v491 = vsel %vm65, %v403, 0.0
    %492 = vadd.xlane.f32.xlu0 %v491
    %v493 = vpop.xlane.xlu0 %492
    %v494 = vsel %vm65, %v404, 0.0
    %495 = vadd.xlane.f32.xlu0 %v494
    %v496 = vpop.xlane.xlu0 %495
    %v497 = vsel %vm65, %v405, 0.0
    %498 = vadd.xlane.f32.xlu0 %v497
    %v499 = vpop.xlane.xlu0 %498
    %v500 = vsel %vm65, %v406, 0.0
    %501 = vadd.xlane.f32.xlu0 %v500
    %v502 = vpop.xlane.xlu0 %501
    %v503 = vlaneseq
    %v504 = vand.u32 %v503, 127
    %vm505 = vcmp.lt.s32.totalorder %v504, 8
    %v538 = vperm.slane %v409, %v504
    %v539 = vadd.s32 %v504, 4294967288
    %v540 = vperm.slane %v412, %v539
    %vm541 = vcmask 130112
    %v542 = vsel %vm541, %v540, %v538
    %v543 = vadd.s32 %v504, 4294967280
    %v544 = vperm.slane %v415, %v543
    %vm545 = vcmask 195712
    %v546 = vsel %vm545, %v544, %v542
    %v547 = vadd.s32 %v504, 4294967272
    %v548 = vperm.slane %v418, %v547
    %vm549 = vcmask 261312
    %v550 = vsel %vm549, %v548, %v546
    %v551 = vadd.s32 %v504, 4294967264
    %v552 = vperm.slane %v421, %v551
    %vm553 = vcmask 326912
    %v554 = vsel %vm553, %v552, %v550
    %v555 = vadd.s32 %v504, 4294967256
    %v556 = vperm.slane %v424, %v555
    %vm557 = vcmask 392512
    %v558 = vsel %vm557, %v556, %v554
    %v559 = vadd.s32 %v504, 4294967248
    %v560 = vperm.slane %v427, %v559
    %vm561 = vcmask 458112
    %v562 = vsel %vm561, %v560, %v558
    %v563 = vadd.s32 %v504, 4294967240
    %v564 = vperm.slane %v430, %v563
    %vm565 = vcmask 523712
    %v566 = vsel %vm565, %v564, %v562
    %v567 = vadd.s32 %v504, 4294967232
    %v568 = vperm.slane %v433, %v567
    %vm569 = vcmask 589312
    %v570 = vsel %vm569, %v568, %v566
    %v571 = vadd.s32 %v504, 4294967224
    %v572 = vperm.slane %v436, %v571
    %vm573 = vcmask 654912
    %v574 = vsel %vm573, %v572, %v570
    %v575 = vadd.s32 %v504, 4294967216
    %v576 = vperm.slane %v439, %v575
    %vm577 = vcmask 720512
    %v578 = vsel %vm577, %v576, %v574
    %v579 = vadd.s32 %v504, 4294967208
    %v580 = vperm.slane %v442, %v579
    %vm581 = vcmask 786112
    %v582 = vsel %vm581, %v580, %v578
    %v583 = vadd.s32 %v504, 4294967200
    %v584 = vperm.slane %v445, %v583
    %vm585 = vcmask 851712
    %v586 = vsel %vm585, %v584, %v582
    %v587 = vadd.s32 %v504, 4294967192
    %v588 = vperm.slane %v448, %v587
    %vm589 = vcmask 917312
    %v590 = vsel %vm589, %v588, %v586
    %v591 = vadd.s32 %v504, 4294967184
    %v592 = vperm.slane %v451, %v591
    %vm593 = vcmask 982912
    %v594 = vsel %vm593, %v592, %v590
    %v595 = vadd.s32 %v504, 4294967176
    %v596 = vperm.slane %v454, %v595
    %vm597 = vcmask 1048512
    %v598 = vsel %vm597, %v596, %v594
    %v599 = vperm.slane %v457, %v504
    %v600 = vperm.slane %v460, %v539
    %v601 = vsel %vm541, %v600, %v599
    %v602 = vperm.slane %v463, %v543
    %v603 = vsel %vm545, %v602, %v601
    %v604 = vperm.slane %v466, %v547
    %v605 = vsel %vm549, %v604, %v603
    %v606 = vperm.slane %v469, %v551
    %v607 = vsel %vm553, %v606, %v605
    %v608 = vperm.slane %v472, %v555
    %v609 = vsel %vm557, %v608, %v607
    %v610 = vperm.slane %v475, %v559
    %v611 = vsel %vm561, %v610, %v609
    %v612 = vperm.slane %v478, %v563
    %v613 = vsel %vm565, %v612, %v611
    %v614 = vperm.slane %v481, %v567
    %v615 = vsel %vm569, %v614, %v613
    %v616 = vperm.slane %v484, %v571
    %v617 = vsel %vm573, %v616, %v615
    %v618 = vperm.slane %v487, %v575
    %v619 = vsel %vm577, %v618, %v617
    %v620 = vperm.slane %v490, %v579
    %v621 = vsel %vm581, %v620, %v619
    %v622 = vperm.slane %v493, %v583
    %v623 = vsel %vm585, %v622, %v621
    %v624 = vperm.slane %v496, %v587
    %v625 = vsel %vm589, %v624, %v623
    %v626 = vperm.slane %v499, %v591
    %v627 = vsel %vm593, %v626, %v625
    %v628 = vperm.slane %v502, %v595
    %v629 = vsel %vm597, %v628, %v627
    %vm630 = vcmask 1041409
    %v631 = vsel %vm630, %v629, %v598
    %v633 = vsel %vm505, %v631, -inf
    %vm634 = vcmask 1041408
    %v635 = vsel %vm634, %v633, -inf
    %636 = vmax.xlane.f32.xlu0 %v635
    %v637 = vpop.xlane.xlu0 %636
    %v638 = vsub.f32 %v633, %v637
    %v639 = vmul.f32 %v638, 1.442695
    %v640 = vpow.pop %v639
    %v641 = vsel %vm634, %v640, 0.0
    %642 = vadd.xlane.f32.xlu0 %v641
    %v643 = vpop.xlane.xlu0 %642
    %v644 = vrcp.pop %v643
    %v645 = vmul.f32 %v643, %v644
    %v646 = vsub.f32 1.0, %v645
    %v647 = vmul.f32 %v644, %v646
    %v648 = vadd.f32 %v644, %v647
    %vm649 = vweird.f32 %v643
    %vm650 = vweird.f32 %v644
    %vm651 = vmor %vm649, %vm650
    %v652 = vsel %vm651, %v644, %v648
    %v653 = vand.u32 2147483647, %v643
    %vm654 = vcmp.eq.f32.partialorder %v653, 8.507059e+37
    %v655 = vand.u32 %v643, 2147483648
    %v656 = vor.u32 1.1754944e-38, %v655
    %v657 = vsel %vm654, %v656, %v652
    %v658 = vmul.f32 %v640, %v657
    %659 = vst [vmem:[#allocation2] sm:$0x3] %v658
    // Predicated region
    $region26: #{lstm_attention.1} parent=1 // pred_check
      _
    $region27: #{lstm_attention.1} parent=1 // pred_check_branch
      %661 = sbr.rel (0) target = $region29
    $region28: #{lstm_attention.1} parent=1 // pred_region
      %663 = vsyncadd [#allocation3], 0
      %s665 = sshll.u32 [#allocation2], 4
      %s666 = int_to_ptr.vmem [resolvable:$true] %s665
      %s667 = sshll.u32 %s6, 4
      %s668 = int_to_ptr.hbm [resolvable:$true] %s667
      %670 = dma.vmem_to_hbm [thread:$0]  %s666, 32, %s668, [#allocation3]
    $region29: #{lstm_attention.1} parent=1 // pred_fallthru
      _
    // Predicated region
    $region30: #{lstm_attention.1} parent=1 // pred_check
      _
    $region31: #{lstm_attention.1} parent=1 // pred_check_branch
      %672 = sbr.rel (0) target = $region33
    $region32: #{lstm_attention.1} parent=1 // pred_region
      %674 = dma.done [#allocation3], 32
    $region33: #{lstm_attention.1} parent=1 // pred_fallthru
      _
    %675 = vsyncpa [#allocation3], 1

</llo_original>
